<compile_context>
chip_gen: v7x
topology: tpu7x:2x2x1
jax: 0.10.0
libtpu: 0.0.40
codegen_flags: <defaults>
</compile_context>

<pallas_src>
import jax
import jax.numpy as jnp
from jax.experimental import pallas as pl
from jax.experimental.pallas import tpu as pltpu


def attention_dist_kernel(node_idx_ref,  # SMEM scalar prefetch: (1,) int32
                          x_ref,         # VMEM (TB, N, F)
                          a_ref,         # VMEM (2, F): row0 = a[:F], row1 = a[F:]
                          e_ref,         # VMEM (TB, N) out -- LeakyReLU scores
                          probs_ref):    # VMEM (TB, N) out -- Categorical(probs=e).probs
    idx = node_idx_ref[0]

    x = x_ref[...]                                   # (TB, N, F)
    a_tgt = a_ref[0:1, :]                            # (1, F) weights for the target-node half
    a_x = a_ref[1:2, :]                              # (1, F) weights for the per-node half

    # target-node features for every batch row in this block: x[:, node_index, :]
    tgt = x_ref[:, pl.ds(idx, 1), :]                 # (TB, 1, F) dynamic sublane gather

    # decomposed concat-matmul (VPU mul + lane reduce, no MXU, no lane-axis concat):
    #   raw[b, n] = <x[b, idx], a[:F]> + <x[b, n], a[F:]>
    tgt_term = jnp.sum(tgt * a_tgt[None, :, :], axis=-1)     # (TB, 1) per-batch scalar
    x_term = jnp.sum(x * a_x[None, :, :], axis=-1)           # (TB, N)
    raw = x_term + tgt_term                                   # (TB, N)

    # LeakyReLU (torch default negative_slope = 0.01)
    e = jnp.where(raw > 0, raw, 0.01 * raw)                   # (TB, N)

    e_ref[...] = e
    # torch.distributions.Categorical(probs=e) stores e / e.sum(-1, keepdim=True).
    # NOTE: faithful to the torch source -- e can be negative / sum~0, so probs can be
    # invalid; torch itself would raise on such values.
    denom = jnp.sum(e, axis=-1, keepdims=True)                # (TB, 1)
    probs_ref[...] = e / denom                                 # exact f32 divide


def attention_dist_forward(x, a, node_index, adj_mask=None, *, tb=64):
    """x: (B, N, F) f32, a: (2F, 1) f32, node_index: scalar int, adj_mask: (N,) (unused:
    the torch forward discards the attention tensor before returning)."""
    B, N, F = x.shape
    x = x.astype(jnp.float32)
    # Lane-major attention vector: row 0 = a[:F] (target-node half), row 1 = a[F:] (x half).
    a_rows = a.astype(jnp.float32).reshape(2, F)
    node_index_arr = jnp.asarray(node_index, dtype=jnp.int32).reshape(1)

    TB = min(B, tb)
    Bp = pl.cdiv(B, TB) * TB
    if Bp != B:
        x = jnp.pad(x, ((0, Bp - B), (0, 0), (0, 0)))  # padded rows sliced off below

    grid_spec = pltpu.PrefetchScalarGridSpec(
        num_scalar_prefetch=1,
        grid=(Bp // TB,),
        in_specs=[
            pl.BlockSpec((TB, N, F), lambda b, ni: (b, 0, 0)),   # x, TB batch rows per step
            pl.BlockSpec((2, F), lambda b, ni: (0, 0)),          # a, replicated (lane-major)
        ],
        out_specs=[
            pl.BlockSpec((TB, N), lambda b, ni: (b, 0)),         # e, lane-dense slab
            pl.BlockSpec((TB, N), lambda b, ni: (b, 0)),         # probs, lane-dense slab
        ],
    )

    e, probs = pl.pallas_call(
        attention_dist_kernel,
        grid_spec=grid_spec,
        out_shape=(
            jax.ShapeDtypeStruct((Bp, N), jnp.float32),
            jax.ShapeDtypeStruct((Bp, N), jnp.float32),
        ),
        compiler_params=pltpu.CompilerParams(dimension_semantics=("parallel",)),
    )(node_index_arr, x, a_rows)

    return e[:B], probs[:B]


def _reference(x, a, node_index):
    B, N, F = x.shape
    tgt = x[:, node_index, :]                                                  # (B, F)
    concat = jnp.concatenate(
        [jnp.broadcast_to(tgt[:, None, :], (B, N, F)), x], axis=-1)            # (B, N, 2F)
    raw = jnp.einsum("bnf,fo->bno", concat, a)[..., 0]                         # (B, N)
    e = jnp.where(raw > 0, raw, 0.01 * raw)
    probs = e / jnp.sum(e, axis=-1, keepdims=True)
    return e, probs


if __name__ == "__main__":
    B, N, F = 2, 8, 16          # batch, node_num, num_inputs
    key = jax.random.PRNGKey(0)
    kx, ka, km = jax.random.split(key, 3)

    x = jax.random.normal(kx, (B, N, F), dtype=jnp.float32)

    # xavier_uniform_ with gain=1.414 on a (2F, 1) parameter
    bound = 1.414 * jnp.sqrt(6.0 / (2 * F + 1))
    a = jax.random.uniform(ka, (2 * F, 1), minval=-bound, maxval=bound, dtype=jnp.float32)

    adj_mask = (jax.random.uniform(km, (N,)) > 0.4).astype(jnp.float32)
    adj_mask = adj_mask.at[0].set(1.0)
    node_index = 3

    e, probs = attention_dist_forward(x, a, node_index, adj_mask)
    jax.block_until_ready((e, probs))

    e_ref, probs_ref = _reference(x, a, node_index)
    # scores and normalization are computed in exact f32 arithmetic -> tight tolerance
    assert jnp.allclose(e, e_ref, atol=1e-5, rtol=1e-5)
    assert jnp.allclose(probs, probs_ref, atol=1e-5, rtol=1e-5)

    print("KERNEL_OK")
</pallas_src>

<mosaic_0001>
module attributes {stable_mosaic.version = 11 : i64} {
  func.func @attention_dist_kernel(%arg0: i32, %arg1: memref<1xi32, #tpu.memory_space<smem>>, %arg2: memref<2x8x16xf32, #tpu.memory_space<vmem>>, %arg3: memref<2x16xf32, #tpu.memory_space<vmem>>, %arg4: memref<2x8xf32, #tpu.memory_space<vmem>>, %arg5: memref<2x8xf32, #tpu.memory_space<vmem>>) attributes {dimension_semantics = [#tpu.dimension_semantics<parallel>], iteration_bounds = array<i64: 1>, scalar_prefetch = 1 : i64, scratch_operands = 0 : i64, tpu.core_type = #tpu.core_type<tc>, window_params = [{transform_indices = @transform_0, window_bounds = array<i64: 2, 8, 16>}, {pipeline_mode = #tpu.pipeline_mode<synchronous>, transform_indices = @transform_1, window_bounds = array<i64: 2, 16>}, {transform_indices = @transform_2, window_bounds = array<i64: 2, 8>}, {transform_indices = @transform_3, window_bounds = array<i64: 2, 8>}]} {
    %c0 = arith.constant 0 : index
    %0 = memref.load %arg1[%c0] : memref<1xi32, #tpu.memory_space<smem>>
    %c0_0 = arith.constant 0 : index
    %c0_1 = arith.constant 0 : index
    %c0_2 = arith.constant 0 : index
    %1 = vector.load %arg2[%c0_0, %c0_1, %c0_2] : memref<2x8x16xf32, #tpu.memory_space<vmem>>, vector<2x8x16xf32>
    %c0_3 = arith.constant 0 : index
    %c0_4 = arith.constant 0 : index
    %2 = vector.load %arg3[%c0_3, %c0_4] : memref<2x16xf32, #tpu.memory_space<vmem>>, vector<1x16xf32>
    %c1 = arith.constant 1 : index
    %c0_5 = arith.constant 0 : index
    %3 = vector.load %arg3[%c1, %c0_5] : memref<2x16xf32, #tpu.memory_space<vmem>>, vector<1x16xf32>
    %c0_6 = arith.constant 0 : index
    %4 = arith.index_cast %0 : i32 to index
    %c0_7 = arith.constant 0 : index
    %5 = vector.load %arg2[%c0_6, %4, %c0_7] : memref<2x8x16xf32, #tpu.memory_space<vmem>>, vector<2x1x16xf32>
    %6 = vector.shape_cast %2 : vector<1x16xf32> to vector<1x1x16xf32>
    %7 = vector.broadcast %6 : vector<1x1x16xf32> to vector<2x1x16xf32>
    %8 = arith.mulf %5, %7 : vector<2x1x16xf32>
    %cst = arith.constant dense<0.000000e+00> : vector<2x1xf32>
    %9 = vector.multi_reduction <add>, %8, %cst [2] : vector<2x1x16xf32> to vector<2x1xf32>
    %10 = vector.shape_cast %3 : vector<1x16xf32> to vector<1x1x16xf32>
    %11 = vector.broadcast %10 : vector<1x1x16xf32> to vector<2x8x16xf32>
    %12 = arith.mulf %1, %11 : vector<2x8x16xf32>
    %cst_8 = arith.constant dense<0.000000e+00> : vector<2x8xf32>
    %13 = vector.multi_reduction <add>, %12, %cst_8 [2] : vector<2x8x16xf32> to vector<2x8xf32>
    %14 = vector.broadcast %9 : vector<2x1xf32> to vector<2x8xf32>
    %15 = arith.addf %13, %14 : vector<2x8xf32>
    %cst_9 = arith.constant 0.000000e+00 : f32
    %16 = vector.broadcast %cst_9 : f32 to vector<2x8xf32>
    %17 = arith.cmpf ogt, %15, %16 : vector<2x8xf32>
    %cst_10 = arith.constant 0.00999999977 : f32
    %18 = vector.broadcast %cst_10 : f32 to vector<2x8xf32>
    %19 = arith.mulf %18, %15 : vector<2x8xf32>
    %20 = arith.select %17, %15, %19 : vector<2x8xi1>, vector<2x8xf32>
    %c0_11 = arith.constant 0 : index
    %c0_12 = arith.constant 0 : index
    %21 = vector.load %arg4[%c0_11, %c0_12] : memref<2x8xf32, #tpu.memory_space<vmem>>, vector<2x8xf32>
    tpu.vector_store %arg4[%c0_11, %c0_12], %20 {strides = array<i32>} : memref<2x8xf32, #tpu.memory_space<vmem>>, vector<2x8xf32>,
    %cst_13 = arith.constant dense<0.000000e+00> : vector<2xf32>
    %22 = vector.multi_reduction <add>, %20, %cst_13 [1] : vector<2x8xf32> to vector<2xf32>
    %23 = vector.shape_cast %22 : vector<2xf32> to vector<2x1xf32>
    %24 = vector.broadcast %23 : vector<2x1xf32> to vector<2x8xf32>
    %25 = arith.divf %20, %24 : vector<2x8xf32>
    %c0_14 = arith.constant 0 : index
    %c0_15 = arith.constant 0 : index
    %26 = vector.load %arg5[%c0_14, %c0_15] : memref<2x8xf32, #tpu.memory_space<vmem>>, vector<2x8xf32>
    tpu.vector_store %arg5[%c0_14, %c0_15], %25 {strides = array<i32>} : memref<2x8xf32, #tpu.memory_space<vmem>>, vector<2x8xf32>,
    return
  }
  func.func @transform_0(%arg0: i32, %arg1: memref<1xi32, #tpu.memory_space<smem>>) -> (i32, i32, i32) {
    %c0_i32 = arith.constant 0 : i32
    %c0_i32_0 = arith.constant 0 : i32
    %c0_i32_1 = arith.constant 0 : i32
    return %arg0, %c0_i32, %c0_i32_0 : i32, i32, i32
  }
  func.func @transform_1(%arg0: i32, %arg1: memref<1xi32, #tpu.memory_space<smem>>) -> (i32, i32) {
    %c0_i32 = arith.constant 0 : i32
    %c0_i32_0 = arith.constant 0 : i32
    %c0_i32_1 = arith.constant 0 : i32
    return %c0_i32, %c0_i32_0 : i32, i32
  }
  func.func @transform_2(%arg0: i32, %arg1: memref<1xi32, #tpu.memory_space<smem>>) -> (i32, i32) {
    %c0_i32 = arith.constant 0 : i32
    %c0_i32_0 = arith.constant 0 : i32
    return %arg0, %c0_i32 : i32, i32
  }
  func.func @transform_3(%arg0: i32, %arg1: memref<1xi32, #tpu.memory_space<smem>>) -> (i32, i32) {
    %c0_i32 = arith.constant 0 : i32
    %c0_i32_0 = arith.constant 0 : i32
    return %arg0, %c0_i32 : i32, i32
  }
}

</mosaic_0001>

<llo_original>
// kernel: tpu_custom_call.1
$region0: #{tpu_custom_call.1}
  #allocation0 [shape = 'u32[]', space=smem, size = 0x4, offset = 0x4, fixed_abs, tag = 'smem constant byte address 0x4 - core index']
  #allocation1 [shape = 'u32[144,128]{1,0:T(1,128)}', space=vmem, size = 0x12000, scoped, tag = 'internal scratch']
  #allocation2 [shape = 's32[1]{0}', space=sflag, size = 0x4, scoped, tag = 'scoped memory for tpu_custom_call.1']
  #allocation3 [shape = 's32[1]{0:T(128)S(6)}', space=smem, size = 0x200, scoped, tag = 'prefetched SMEM operand 0']
  %s0 = inlined_call_operand.<no memory space> [shape: s32[1], index: 0, kind: input, shape index: {}]
  %s1 = inlined_call_operand.hbm [shape: f32[2,8,16], index: 1, kind: input, shape index: {}]
  %s2 = inlined_call_operand.vmem [shape: f32[2,16], index: 2, kind: input, shape index: {}]
  %s3 = inlined_call_operand.hbm [shape: f32[2,8], index: 3, kind: output, shape index: {0}]
  %s4 = inlined_call_operand.hbm [shape: f32[2,8], index: 4, kind: output, shape index: {1}]
  %5 = xla_tuple %s3, %s4
  %s6 = sld [smem:[#allocation0]]
  $region30: #{tpu_custom_call.1} parent=0
    _
  %s8 = ssub.s32 1, %s6
  %s9 = scalar_select 0, %s8, %s6
  %10 = sst [smem:[#allocation3]] %s0
  $region1: #{tpu_custom_call.1} parent=0
    #allocation4 [shape = 'u8[8192]{0}', space=vmem, size = 0x2000, scoped, tag = 'input window, operand 1, single buffered']
    #allocation5 [shape = 's32[1]{0}', space=sflag, size = 0x4, scoped, tag = 'scoped memory for tpu_custom_call.1']
    #allocation6 [shape = 's32[1]{0}', space=sflag, size = 0x4, scoped, tag = 'scoped memory for tpu_custom_call.1']
    #allocation7 [shape = 'u8[1024]{0}', space=vmem, size = 0x400, scoped, tag = 'output window, operand 0, single buffered']
    #allocation8 [shape = 'u8[1024]{0}', space=vmem, size = 0x400, scoped, tag = 'output window, operand 1, single buffered']
    #allocation9 [shape = 's32[1]{0}', space=sflag, size = 0x4, scoped, tag = 'scoped memory for tpu_custom_call.1']
    %11 = vsyncpa [#allocation5], 0
    %12 = vsyncpa [#allocation6], 0
    %13 = vsyncpa [#allocation9], 0
    // Predicated region
    $region2: #{tpu_custom_call.1} parent=1 // pred_check
      _
    $region3: #{tpu_custom_call.1} parent=1 // pred_check_branch
      %15 = sbr.rel (0) target = $region5
    $region4: #{tpu_custom_call.1} parent=1 // pred_region
      %s17 = ssub.s32 256, 256
      %18 = vsyncadd [#allocation5], %s17
      %s19 = sshll.u32 [#allocation4], 4
      %s20 = int_to_ptr.vmem [resolvable:$true] %s19
      %25 = dma.hbm_to_vmem [thread:$0]  %s1, 256, %s20, [#allocation5], 128, 128, 8
    $region5: #{tpu_custom_call.1} parent=1 // pred_fallthru
      _
    // Predicated region
    $region6: #{tpu_custom_call.1} parent=1 // pred_check
      _
    $region7: #{tpu_custom_call.1} parent=1 // pred_check_branch
      %27 = sbr.rel (0) target = $region9
    $region8: #{tpu_custom_call.1} parent=1 // pred_region
      _
    $region9: #{tpu_custom_call.1} parent=1 // pred_fallthru
      _
    // Predicated region
    $region10: #{tpu_custom_call.1} parent=1 // pred_check
      _
    $region11: #{tpu_custom_call.1} parent=1 // pred_check_branch
      %29 = sbr.rel (0) target = $region13
    $region12: #{tpu_custom_call.1} parent=1 // pred_region
      %30 = dma.done [#allocation5], 256
    $region13: #{tpu_custom_call.1} parent=1 // pred_fallthru
      _
    %s31 = sld [smem:[#allocation3]]
    %v32 = vld [vmem:[#allocation4] sm:$0xff]
    %v33 = vld [vmem:[#allocation4 + $0x8] sm:$0xff]
    %v34 = vld [vmem:[%s2] sm:$0x1]
    %v35 = vld [vmem:[%s2 + $0x1] sm:$0x1]
    %s36 = scalar_lea.vmem [#allocation4], %s31
    %v37 = vld [vmem:[%s36] sm:$0x1]
    %v38 = vld [vmem:[%s36 + $0x8] sm:$0x1]
    %v39 = vmul.f32 %v37, %v34
    %v40 = vmul.f32 %v38, %v34
    %vm41 = vcmask 122880
    %v42 = vsel %vm41, %v39, 0.0
    %43 = vadd.xlane.f32.xlu0 %v42
    %v44 = vpop.xlane.xlu0 %43
    %v45 = vsel %vm41, %v40, 0.0
    %46 = vadd.xlane.f32.xlu0 %v45
    %v47 = vpop.xlane.xlu0 %46
    %v48 = vlaneseq
    %v49 = vshrl.u32 %v48, 7
    %v50 = vsub.s32 0, %v49
    %v51 = vrot.slane %v35, %v50
    %v52 = vmul.f32 %v32, %v51
    %v53 = vmul.f32 %v33, %v51
    %vm54 = vcmask 130048
    %v55 = vsel %vm54, %v52, 0.0
    %56 = vadd.xlane.f32.xlu0 %v55
    %v57 = vpop.xlane.xlu0 %56
    %v58 = vsel %vm54, %v53, 0.0
    %59 = vadd.xlane.f32.xlu0 %v58
    %v60 = vpop.xlane.xlu0 %59
    %v61 = vlaneseq
    %v62 = vshrl.u32 %v61, 7
    %v63 = vsub.s32 0, %v62
    %v64 = vrot.slane %v44, %v63
    %v65 = vlaneseq
    %v66 = vshrl.u32 %v65, 7
    %v67 = vsub.s32 0, %v66
    %v68 = vrot.slane %v47, %v67
    %v69 = vadd.f32 %v57, %v64
    %v70 = vadd.f32 %v60, %v68
    %vm71 = vcmp.gt.f32.partialorder %v69, 0.0
    %vm72 = vcmp.gt.f32.partialorder %v70, 0.0
    %v73 = vmul.f32 %v69, 0.01
    %v74 = vmul.f32 %v70, 0.01
    %v75 = vsel %vm71, %v69, %v73
    %v76 = vsel %vm72, %v70, %v74
    %v79 = vlaneseq
    %v80 = vand.u32 %v79, 127
    %v81 = vlaneseq
    %v82 = vshrl.u32 %v81, 7
    %v83 = vsub.s32 %v80, %v82
    %v84 = vrot.slane %v75, %v83
    %v85 = vlaneseq
    %v86 = vshrl.u32 %v85, 7
    %v87 = vsub.s32 %v80, %v86
    %v88 = vrot.slane %v76, %v87
    %vm89 = vcmask 1041409
    %v90 = vsel %vm89, %v88, %v84
    %vm92 = vcmask 58368
    %93 = vst.msk [vmem:[#allocation7] sm:$0x3] %vm92, %v90
    %v94 = vsel %vm92, %v90, 0.0
    %95 = vadd.xlane.f32.xlu0 %v94
    %v96 = vpop.xlane.xlu0 %95
    %v98 = vlaneseq
    %v99 = vshrl.u32 %v98, 7
    %v100 = vsub.s32 0, %v99
    %v101 = vrot.slane %v96, %v100
    %v102 = vlaneseq
    %v103 = vshrl.u32 %v102, 7
    %v104 = vsub.s32 1, %v103
    %v105 = vrot.slane %v96, %v104
    %v108 = vrcp.pop %v101
    %v109 = vmul.f32 %v75, %v108
    %v110 = vrcp.pop %v105
    %v111 = vmul.f32 %v76, %v110
    %114 = vset.pattern.permute.xlu0 0
    %115 = vperm.xlu0 %114, %v109
    %v116 = vpop.permute.xlu0 %115
    %117 = vset.pattern.permute.xlu0 0
    %118 = vperm.xlu0 %117, %v111
    %v119 = vpop.permute.xlu0 %118
    %v120 = vlaneseq
    %v121 = vshrl.u32 %v120, 7
    %v122 = vsub.s32 %v80, %v121
    %v123 = vrot.slane %v116, %v122
    %v124 = vlaneseq
    %v125 = vshrl.u32 %v124, 7
    %v126 = vsub.s32 %v80, %v125
    %v127 = vrot.slane %v119, %v126
    %v128 = vsel %vm89, %v127, %v123
    %130 = vst.msk [vmem:[#allocation8] sm:$0x3] %vm92, %v128
    // Predicated region
    $region14: #{tpu_custom_call.1} parent=1 // pred_check
      _
    $region15: #{tpu_custom_call.1} parent=1 // pred_check_branch
      %132 = sbr.rel (0) target = $region17
    $region16: #{tpu_custom_call.1} parent=1 // pred_region
      %s134 = ssub.s32 32, 32
      %135 = vsyncadd [#allocation6], %s134
      %s137 = sshll.u32 [#allocation7], 4
      %s138 = int_to_ptr.vmem [resolvable:$true] %s137
      %140 = dma.vmem_to_hbm [thread:$0]  %s138, 32, %s3, [#allocation6]
    $region17: #{tpu_custom_call.1} parent=1 // pred_fallthru
      _
    // Predicated region
    $region18: #{tpu_custom_call.1} parent=1 // pred_check
      _
    $region19: #{tpu_custom_call.1} parent=1 // pred_check_branch
      %142 = sbr.rel (0) target = $region21
    $region20: #{tpu_custom_call.1} parent=1 // pred_region
      %s144 = ssub.s32 32, 32
      %145 = vsyncadd [#allocation9], %s144
      %s147 = sshll.u32 [#allocation8], 4
      %s148 = int_to_ptr.vmem [resolvable:$true] %s147
      %150 = dma.vmem_to_hbm [thread:$0]  %s148, 32, %s4, [#allocation9]
    $region21: #{tpu_custom_call.1} parent=1 // pred_fallthru
      _
    // Predicated region
    $region22: #{tpu_custom_call.1} parent=1 // pred_check
      _
    $region23: #{tpu_custom_call.1} parent=1 // pred_check_branch
      %152 = sbr.rel (0) target = $region25
    $region24: #{tpu_custom_call.1} parent=1 // pred_region
      %153 = dma.done [#allocation6], 32
    $region25: #{tpu_custom_call.1} parent=1 // pred_fallthru
      _
    // Predicated region
    $region26: #{tpu_custom_call.1} parent=1 // pred_check
      _
    $region27: #{tpu_custom_call.1} parent=1 // pred_check_branch
      %155 = sbr.rel (0) target = $region29
    $region28: #{tpu_custom_call.1} parent=1 // pred_region
      %156 = dma.done [#allocation9], 32
    $region29: #{tpu_custom_call.1} parent=1 // pred_fallthru
      _
    %157 = vsyncpa [#allocation5], 1
    %158 = vsyncpa [#allocation6], 1
    %159 = vsyncpa [#allocation9], 1

</llo_original>
